<compile_context>
chip_gen: v7x
topology: tpu7x:2x2x1
jax: 0.10.0
libtpu: 0.0.40
codegen_flags: <defaults>
</compile_context>

<pallas_src>
import functools

import jax
import jax.numpy as jnp
from jax import lax
from jax.experimental import pallas as pl
from jax.experimental.pallas import tpu as pltpu


def _round_up(x, m):
    return ((x + m - 1) // m) * m


def _pick_time_chunk(M, B=1, target=128):
    """Largest chunk <= target dividing M (preferring chunk*B % 8 == 0 for dense stores)."""
    if M <= target:
        return M
    best = None
    for c in range(target, 0, -1):
        if M % c == 0:
            if (c * B) % 8 == 0:
                return c
            if best is None:
                best = c
    return best if best is not None else M


def _tpu_vmem_capacity_bytes():
    try:
        info = pltpu.get_tpu_info()
        for attr in ("vmem_capacity_bytes", "vmem_bytes", "vmem_size_bytes"):
            v = getattr(info, attr, None)
            if v:
                return int(v)
    except Exception:
        pass
    return 64 << 20          # conservative fallback (v7x per-TC physical VMEM)


def _vmem_limit(need_bytes):
    # Generation-aware: ~15% headroom below physical VMEM for compiler scratch / pipeline
    # buffers (v7x: ~54 MiB, v5e/v6e: ~108 MiB); never below 32 MiB (or the cap).
    cap = _tpu_vmem_capacity_bytes()
    hi = int(cap * 0.85)
    lo = min(32 << 20, hi)
    return int(max(lo, min(2 * need_bytes + (4 << 20), hi)))


# --------------------------------------------------------------------------------------
# Kernel 1: masked mean pooling fused with the LSTM input projection (+ folded gate bias),
#           emitted time-major so the serial recurrence can consume it with one load/step.
# --------------------------------------------------------------------------------------
def pool_proj_kernel(t_ref, h_ref, wih_ref, b_ref, gx_ref, *, approx):
    """t_ref: (TM,B,S) time-major pooling chunk; h_ref: (B,S,E) grid-invariant hidden states;
    wih_ref: (E,4Hp); b_ref: (1,4Hp) f32; gx_ref: (TM,B,4Hp) time-major gate pre-activations."""
    B = h_ref.shape[0]
    for b in range(B):                       # static; per-batch pooling + fused projection
        t_b = t_ref[:, b, :]                                                  # (TM, S)
        pooled = jnp.dot(t_b, h_ref[b], preferred_element_type=jnp.float32)   # (TM, E) MXU
        div = jnp.sum(t_b.astype(jnp.float32), axis=1, keepdims=True)         # (TM, 1) exact
        div = jnp.where(div == 0.0, jnp.float32(1e-5), div)                   # div==0 -> 1e-5
        pooled = pooled * pl.reciprocal(div, approx=approx)
        # fused input projection: pooled @ W_ih^T + (b_ih + b_hh), hoisted off the recurrence
        gates = (jnp.dot(pooled.astype(wih_ref.dtype), wih_ref[...],
                         preferred_element_type=jnp.float32) + b_ref[...])    # (TM, 4Hp)
        gx_ref[:, b, :] = gates.astype(gx_ref.dtype)


def pooled_input_proj(T_tm, hidden, w_ihT, gate_bias, gx_dtype, approx):
    """T_tm: (M,B,S), hidden: (B,S,E), w_ihT: (E,G), gate_bias: (1,G) -> gates_x (M,B,G)."""
    M, B, S = T_tm.shape
    E = hidden.shape[2]
    G = w_ihT.shape[1]
    TM = _pick_time_chunk(M)
    itc = jnp.dtype(T_tm.dtype).itemsize
    itg = jnp.dtype(gx_dtype).itemsize
    need = (2 * TM * B * S * itc + 2 * B * S * E * itc
            + 2 * E * G * itc + 2 * G * 4
            + 2 * TM * max(B, 8) * G * itg)
    grid_spec = pltpu.PrefetchScalarGridSpec(
        num_scalar_prefetch=0,
        grid=(M // TM,),
        in_specs=[pl.BlockSpec((TM, B, S), lambda m: (m, 0, 0)),   # time chunk of T
                  pl.BlockSpec((B, S, E), lambda m: (0, 0, 0)),    # grid-invariant hidden
                  pl.BlockSpec((E, G), lambda m: (0, 0)),          # grid-invariant weights
                  pl.BlockSpec((1, G), lambda m: (0, 0))],         # grid-invariant bias
        out_specs=pl.BlockSpec((TM, B, G), lambda m: (m, 0, 0)))   # TIME-MAJOR output
    return pl.pallas_call(
        functools.partial(pool_proj_kernel, approx=approx),
        out_shape=jax.ShapeDtypeStruct((M, B, G), gx_dtype),
        grid_spec=grid_spec,
        compiler_params=pltpu.CompilerParams(
            dimension_semantics=("parallel",),
            vmem_limit_bytes=_vmem_limit(need)),
    )(T_tm, hidden, w_ihT, gate_bias)


# --------------------------------------------------------------------------------------
# Kernel 2: time-chunked LSTM recurrence (PyTorch gate order i,f,g,o) + per-chunk
#           lane-dense classifier.  h/c state persists in scratch across grid steps.
# --------------------------------------------------------------------------------------
def lstm_cls_kernel(gx_ref, w_hh_ref, w_c_ref, b_c_ref, out_ref, h_scr, c_scr, hist_scr):
    """gx_ref: (TM,B,4Hp) time-major gates chunk; w_hh_ref: (Hp,4Hp); w_c_ref: (Hp,Cpad);
    b_c_ref: (1,Cpad) f32; out_ref: (TM*B,Cpad) rows t*B+b; scratch: h,c (B,Hp) f32 carried,
    hist (TM*B,Hp) per-chunk hidden history."""
    TM, B, G = gx_ref.shape
    Hp = w_hh_ref.shape[0]

    @pl.when(pl.program_id(0) == 0)
    def _init():
        h_scr[...] = jnp.zeros_like(h_scr)
        c_scr[...] = jnp.zeros_like(c_scr)

    def step(t, carry):
        gx_t = gx_ref[t]                                            # (B, G) one contiguous load
        gates = gx_t.astype(jnp.float32) + jnp.dot(
            h_scr[...].astype(w_hh_ref.dtype), w_hh_ref[...],
            preferred_element_type=jnp.float32)                     # (B, G) f32
        i_g = jax.nn.sigmoid(gates[:, 0 * Hp:1 * Hp])               # 128-lane-aligned slices
        f_g = jax.nn.sigmoid(gates[:, 1 * Hp:2 * Hp])
        g_g = jnp.tanh(gates[:, 2 * Hp:3 * Hp])
        o_g = jax.nn.sigmoid(gates[:, 3 * Hp:4 * Hp])
        c_new = f_g * c_scr[...] + i_g * g_g
        h_new = o_g * jnp.tanh(c_new)
        h_scr[...] = h_new
        c_scr[...] = c_new
        hist_scr[pl.ds(t * B, B), :] = h_new.astype(hist_scr.dtype)  # time-major rows t*B+b
        return carry

    lax.fori_loop(0, TM, step, 0, unroll=4)

    # one lane-dense classifier matmul per chunk (dropout is identity in eval mode)
    out_ref[...] = (jnp.dot(hist_scr[...], w_c_ref[...],
                            preferred_element_type=jnp.float32)
                    + b_c_ref[...]).astype(out_ref.dtype)


def lstm_classifier(gates_x, w_hhT, w_cT_pad, b_c_pad, out_dtype, hist_dtype):
    """gates_x: (M,B,G) time-major -> logits2d (M*B, Cpad) with row index t*B + b."""
    M, B, G = gates_x.shape
    Hp = w_hhT.shape[0]
    Cpad = w_cT_pad.shape[1]
    TM = _pick_time_chunk(M, B)
    Bp = max(B, 8)
    itg = jnp.dtype(gates_x.dtype).itemsize
    ith = jnp.dtype(hist_dtype).itemsize
    itw = jnp.dtype(w_hhT.dtype).itemsize
    need = (2 * TM * Bp * G * itg
            + 2 * Hp * G * itw + 2 * Hp * Cpad * ith + 2 * Cpad * 4
            + 2 * TM * Bp * Cpad * jnp.dtype(out_dtype).itemsize
            + 2 * Bp * Hp * 4 + TM * Bp * Hp * ith)
    grid_spec = pltpu.PrefetchScalarGridSpec(
        num_scalar_prefetch=0,
        grid=(M // TM,),
        in_specs=[pl.BlockSpec((TM, B, G), lambda m: (m, 0, 0)),    # streamed gx time chunks
                  pl.BlockSpec((Hp, G), lambda m: (0, 0)),          # resident W_hh^T
                  pl.BlockSpec((Hp, Cpad), lambda m: (0, 0)),       # resident classifier W
                  pl.BlockSpec((1, Cpad), lambda m: (0, 0))],       # resident classifier b
        out_specs=pl.BlockSpec((TM * B, Cpad), lambda m: (m, 0)),
        scratch_shapes=[pltpu.VMEM((B, Hp), jnp.float32),           # h state (carried)
                        pltpu.VMEM((B, Hp), jnp.float32),           # c state (carried)
                        pltpu.VMEM((TM * B, Hp), hist_dtype)])      # per-chunk h history
    return pl.pallas_call(
        lstm_cls_kernel,
        out_shape=jax.ShapeDtypeStruct((M * B, Cpad), out_dtype),
        grid_spec=grid_spec,
        compiler_params=pltpu.CompilerParams(
            dimension_semantics=("arbitrary",),          # serial: state carried in scratch
            vmem_limit_bytes=_vmem_limit(need)),
    )(gates_x, w_hhT, w_cT_pad, b_c_pad)


# --------------------------------------------------------------------------------------
# Wrapper: parameter repacking (gate-aligned padding) + the two pallas_calls
# --------------------------------------------------------------------------------------
def bert_tagger_forward(hidden, T, params, compute_dtype=jnp.float32):
    """hidden: (B,S,E) transformer last_hidden_state; T: (B,M,S) word-pooling matrix."""
    w_ih, w_hh, b_ih, b_hh, w_c, b_c = params
    B, S, E = hidden.shape
    M = T.shape[1]
    H = w_hh.shape[1]
    C = w_c.shape[0]
    Hp = _round_up(H, 128)       # lane-aligned hidden size; padding is mathematically inert
    G = 4 * Hp
    Cpad = _round_up(max(C, 1), 128)

    exact = jnp.dtype(compute_dtype) == jnp.dtype(jnp.float32)
    cd = compute_dtype
    gx_dtype = jnp.float32 if exact else jnp.bfloat16      # inter-kernel HBM tensor
    hist_dtype = jnp.float32 if exact else jnp.bfloat16    # classifier matmul inputs
    out_dtype = jnp.float32 if exact else jnp.bfloat16

    # repack LSTM params so each gate occupies its own 128-lane-aligned Hp group
    def pad_gate_rows(w, cols):
        out = jnp.zeros((G, cols), w.dtype)
        for k in range(4):
            out = out.at[k * Hp:k * Hp + H].set(w[k * H:(k + 1) * H])
        return out

    w_ih_p = pad_gate_rows(w_ih, E)                                        # (G, E)
    w_hh_p = jnp.zeros((G, Hp), w_hh.dtype).at[:, :H].set(pad_gate_rows(w_hh, H))
    b_gate = (b_ih + b_hh).astype(jnp.float32)
    b_gate_p = jnp.zeros((G,), jnp.float32)
    for k in range(4):
        b_gate_p = b_gate_p.at[k * Hp:k * Hp + H].set(b_gate[k * H:(k + 1) * H])

    w_ihT = w_ih_p.T.astype(cd)                                            # (E, G)
    gate_bias = b_gate_p[None, :]                                          # (1, G) f32
    w_hhT = w_hh_p.T.astype(cd)                                            # (Hp, G)
    w_cT_pad = jnp.zeros((Hp, Cpad), hist_dtype).at[:H, :C].set(w_c.T.astype(hist_dtype))
    b_c_pad = jnp.zeros((1, Cpad), jnp.float32).at[0, :C].set(b_c.astype(jnp.float32))

    # T is pre-transposed (cheap XLA op) so kernel 1 emits gates_x time-major directly.
    T_tm = jnp.transpose(T, (1, 0, 2)).astype(cd)                          # (M, B, S)

    gates_x = pooled_input_proj(T_tm, hidden.astype(cd), w_ihT, gate_bias,
                                gx_dtype=gx_dtype, approx=not exact)       # (M, B, G)
    out2d = lstm_classifier(gates_x, w_hhT, w_cT_pad, b_c_pad,
                            out_dtype=out_dtype, hist_dtype=hist_dtype)    # (M*B, Cpad)
    # rows are ordered t*B + b -> (M, B, C) -> (B, M, C); tiny slice/reshape in the wrapper
    return out2d[:, :C].reshape(M, B, C).transpose(1, 0, 2).astype(jnp.float32)


# --------------------------------------------------------------------------------------
# Pure-JAX reference for verification
# --------------------------------------------------------------------------------------
def reference_forward(hidden, T, params):
    w_ih, w_hh, b_ih, b_hh, w_c, b_c = params
    H = w_hh.shape[1]
    pooled = jnp.einsum('bms,bse->bme', T, hidden)
    div = jnp.sum(T, axis=2, keepdims=True)
    div = jnp.where(div == 0.0, 1e-5, div)
    pooled = pooled / div
    B, M, E = pooled.shape

    def cell(carry, x_t):
        h, c = carry
        gates = x_t @ w_ih.T + h @ w_hh.T + b_ih + b_hh
        i = jax.nn.sigmoid(gates[:, :H])
        f = jax.nn.sigmoid(gates[:, H:2 * H])
        g = jnp.tanh(gates[:, 2 * H:3 * H])
        o = jax.nn.sigmoid(gates[:, 3 * H:])
        c = f * c + i * g
        h = o * jnp.tanh(c)
        return (h, c), h

    (_, _), hs = lax.scan(cell, (jnp.zeros((B, H)), jnp.zeros((B, H))),
                          jnp.transpose(pooled, (1, 0, 2)))
    hs = jnp.transpose(hs, (1, 0, 2))                            # (B, M, H)
    return hs @ w_c.T + b_c


if __name__ == "__main__":
    B, S, M = 2, 16, 8          # batch, subword seq len, word seq len
    E = 32                      # emb_size
    H = 32                      # hid_size (== emb_size so classifier Linear is consistent)
    C = 3

    key = jax.random.PRNGKey(0)
    k = jax.random.split(key, 8)

    hidden = jax.random.normal(k[0], (B, S, E), jnp.float32)       # transformer output stand-in
    T = (jax.random.uniform(k[1], (B, M, S)) > 0.6).astype(jnp.float32)
    T = T.at[:, -1, :].set(0.0)                                    # exercise divisor==0 path

    w_ih = 0.1 * jax.random.normal(k[2], (4 * H, E), jnp.float32)  # PyTorch LSTM weight_ih_l0
    w_hh = 0.1 * jax.random.normal(k[3], (4 * H, H), jnp.float32)  # weight_hh_l0
    b_ih = 0.1 * jax.random.normal(k[4], (4 * H,), jnp.float32)
    b_hh = 0.1 * jax.random.normal(k[5], (4 * H,), jnp.float32)
    w_c = 0.1 * jax.random.normal(k[6], (C, H), jnp.float32)       # classifier weight
    b_c = 0.1 * jax.random.normal(k[7], (C,), jnp.float32)
    params = (w_ih, w_hh, b_ih, b_hh, w_c, b_c)

    ref = reference_forward(hidden, T, params)

    # exact (fp32) path
    out = jax.block_until_ready(bert_tagger_forward(hidden, T, params,
                                                    compute_dtype=jnp.float32))
    assert out.shape == (B, M, C), out.shape
    assert jnp.allclose(out, ref, rtol=1e-5, atol=1e-5), float(jnp.max(jnp.abs(out - ref)))

    # perf path: bf16 matmul inputs + bf16 inter-kernel gates_x / history, fp32 accumulate
    out_bf = jax.block_until_ready(bert_tagger_forward(hidden, T, params,
                                                       compute_dtype=jnp.bfloat16))
    assert jnp.allclose(out_bf, ref, rtol=3e-2, atol=3e-2), float(jnp.max(jnp.abs(out_bf - ref)))

    print("KERNEL_OK")
</pallas_src>

<mosaic_0001>
module attributes {stable_mosaic.version = 11 : i64} {
  func.func @pool_proj_kernel(%arg0: i32, %arg1: memref<8x2x16xf32, #tpu.memory_space<vmem>>, %arg2: memref<2x16x32xf32, #tpu.memory_space<vmem>>, %arg3: memref<32x512xf32, #tpu.memory_space<vmem>>, %arg4: memref<1x512xf32, #tpu.memory_space<vmem>>, %arg5: memref<8x2x512xf32, #tpu.memory_space<vmem>>) attributes {dimension_semantics = [#tpu.dimension_semantics<parallel>], iteration_bounds = array<i64: 1>, scalar_prefetch = 0 : i64, scratch_operands = 0 : i64, tpu.core_type = #tpu.core_type<tc>, window_params = [{transform_indices = @transform_0, window_bounds = array<i64: 8, 2, 16>}, {pipeline_mode = #tpu.pipeline_mode<synchronous>, transform_indices = @transform_1, window_bounds = array<i64: 2, 16, 32>}, {pipeline_mode = #tpu.pipeline_mode<synchronous>, transform_indices = @transform_2, window_bounds = array<i64: 32, 512>}, {pipeline_mode = #tpu.pipeline_mode<synchronous>, transform_indices = @transform_3, window_bounds = array<i64: 1, 512>}, {transform_indices = @transform_4, window_bounds = array<i64: 8, 2, 512>}]} {
    %c0 = arith.constant 0 : index
    %c0_0 = arith.constant 0 : index
    %c0_1 = arith.constant 0 : index
    %0 = vector.load %arg1[%c0, %c0_0, %c0_1] : memref<8x2x16xf32, #tpu.memory_space<vmem>>, vector<8x1x16xf32>
    %1 = vector.shape_cast %0 : vector<8x1x16xf32> to vector<8x16xf32>
    %c0_2 = arith.constant 0 : index
    %c0_3 = arith.constant 0 : index
    %c0_4 = arith.constant 0 : index
    %2 = vector.load %arg2[%c0_2, %c0_3, %c0_4] : memref<2x16x32xf32, #tpu.memory_space<vmem>>, vector<1x16x32xf32>
    %3 = vector.shape_cast %2 : vector<1x16x32xf32> to vector<16x32xf32>
    %cst = arith.constant dense<0.000000e+00> : vector<8x32xf32>
    %4 = tpu.matmul %1, %3, %cst {dimension_numbers = #tpu.dot_dimension_numbers<[1], [0], [0], [1], [0, 0, 1, 1], [], []>} : vector<8x16xf32>, vector<16x32xf32>, vector<8x32xf32> -> vector<8x32xf32>
    %cst_5 = arith.constant dense<0.000000e+00> : vector<8xf32>
    %5 = vector.multi_reduction <add>, %1, %cst_5 [1] : vector<8x16xf32> to vector<8xf32>
    %6 = vector.shape_cast %5 : vector<8xf32> to vector<8x1xf32>
    %cst_6 = arith.constant 0.000000e+00 : f32
    %7 = vector.broadcast %cst_6 : f32 to vector<8x1xf32>
    %8 = arith.cmpf oeq, %6, %7 : vector<8x1xf32>
    %cst_7 = arith.constant 9.99999974E-6 : f32
    %9 = vector.broadcast %cst_7 : f32 to vector<8x1xf32>
    %10 = arith.select %8, %9, %6 : vector<8x1xi1>, vector<8x1xf32>
    %11 = tpu.reciprocal %10 : vector<8x1xf32> -> vector<8x1xf32>
    %12 = vector.broadcast %11 : vector<8x1xf32> to vector<8x32xf32>
    %13 = arith.mulf %4, %12 : vector<8x32xf32>
    %c0_8 = arith.constant 0 : index
    %c0_9 = arith.constant 0 : index
    %14 = vector.load %arg3[%c0_8, %c0_9] : memref<32x512xf32, #tpu.memory_space<vmem>>, vector<32x512xf32>
    %cst_10 = arith.constant dense<0.000000e+00> : vector<8x512xf32>
    %15 = tpu.matmul %13, %14, %cst_10 {dimension_numbers = #tpu.dot_dimension_numbers<[1], [0], [0], [1], [0, 0, 1, 1], [], []>} : vector<8x32xf32>, vector<32x512xf32>, vector<8x512xf32> -> vector<8x512xf32>
    %c0_11 = arith.constant 0 : index
    %c0_12 = arith.constant 0 : index
    %16 = vector.load %arg4[%c0_11, %c0_12] : memref<1x512xf32, #tpu.memory_space<vmem>>, vector<1x512xf32>
    %17 = vector.broadcast %16 : vector<1x512xf32> to vector<8x512xf32>
    %18 = arith.addf %15, %17 : vector<8x512xf32>
    %c0_13 = arith.constant 0 : index
    %c0_14 = arith.constant 0 : index
    %c0_15 = arith.constant 0 : index
    %19 = vector.load %arg5[%c0_13, %c0_14, %c0_15] : memref<8x2x512xf32, #tpu.memory_space<vmem>>, vector<8x1x512xf32>
    %20 = vector.shape_cast %19 : vector<8x1x512xf32> to vector<8x512xf32>
    %21 = vector.shape_cast %18 : vector<8x512xf32> to vector<8x1x512xf32>
    tpu.vector_store %arg5[%c0_13, %c0_14, %c0_15], %21 {strides = array<i32>} : memref<8x2x512xf32, #tpu.memory_space<vmem>>, vector<8x1x512xf32>,
    %c0_16 = arith.constant 0 : index
    %c1 = arith.constant 1 : index
    %c0_17 = arith.constant 0 : index
    %22 = vector.load %arg1[%c0_16, %c1, %c0_17] : memref<8x2x16xf32, #tpu.memory_space<vmem>>, vector<8x1x16xf32>
    %23 = vector.shape_cast %22 : vector<8x1x16xf32> to vector<8x16xf32>
    %c1_18 = arith.constant 1 : index
    %c0_19 = arith.constant 0 : index
    %c0_20 = arith.constant 0 : index
    %24 = vector.load %arg2[%c1_18, %c0_19, %c0_20] : memref<2x16x32xf32, #tpu.memory_space<vmem>>, vector<1x16x32xf32>
    %25 = vector.shape_cast %24 : vector<1x16x32xf32> to vector<16x32xf32>
    %cst_21 = arith.constant dense<0.000000e+00> : vector<8x32xf32>
    %26 = tpu.matmul %23, %25, %cst_21 {dimension_numbers = #tpu.dot_dimension_numbers<[1], [0], [0], [1], [0, 0, 1, 1], [], []>} : vector<8x16xf32>, vector<16x32xf32>, vector<8x32xf32> -> vector<8x32xf32>
    %cst_22 = arith.constant dense<0.000000e+00> : vector<8xf32>
    %27 = vector.multi_reduction <add>, %23, %cst_22 [1] : vector<8x16xf32> to vector<8xf32>
    %28 = vector.shape_cast %27 : vector<8xf32> to vector<8x1xf32>
    %cst_23 = arith.constant 0.000000e+00 : f32
    %29 = vector.broadcast %cst_23 : f32 to vector<8x1xf32>
    %30 = arith.cmpf oeq, %28, %29 : vector<8x1xf32>
    %cst_24 = arith.constant 9.99999974E-6 : f32
    %31 = vector.broadcast %cst_24 : f32 to vector<8x1xf32>
    %32 = arith.select %30, %31, %28 : vector<8x1xi1>, vector<8x1xf32>
    %33 = tpu.reciprocal %32 : vector<8x1xf32> -> vector<8x1xf32>
    %34 = vector.broadcast %33 : vector<8x1xf32> to vector<8x32xf32>
    %35 = arith.mulf %26, %34 : vector<8x32xf32>
    %c0_25 = arith.constant 0 : index
    %c0_26 = arith.constant 0 : index
    %36 = vector.load %arg3[%c0_25, %c0_26] : memref<32x512xf32, #tpu.memory_space<vmem>>, vector<32x512xf32>
    %cst_27 = arith.constant dense<0.000000e+00> : vector<8x512xf32>
    %37 = tpu.matmul %35, %36, %cst_27 {dimension_numbers = #tpu.dot_dimension_numbers<[1], [0], [0], [1], [0, 0, 1, 1], [], []>} : vector<8x32xf32>, vector<32x512xf32>, vector<8x512xf32> -> vector<8x512xf32>
    %c0_28 = arith.constant 0 : index
    %c0_29 = arith.constant 0 : index
    %38 = vector.load %arg4[%c0_28, %c0_29] : memref<1x512xf32, #tpu.memory_space<vmem>>, vector<1x512xf32>
    %39 = vector.broadcast %38 : vector<1x512xf32> to vector<8x512xf32>
    %40 = arith.addf %37, %39 : vector<8x512xf32>
    %c0_30 = arith.constant 0 : index
    %c1_31 = arith.constant 1 : index
    %c0_32 = arith.constant 0 : index
    %41 = vector.load %arg5[%c0_30, %c1_31, %c0_32] : memref<8x2x512xf32, #tpu.memory_space<vmem>>, vector<8x1x512xf32>
    %42 = vector.shape_cast %41 : vector<8x1x512xf32> to vector<8x512xf32>
    %43 = vector.shape_cast %40 : vector<8x512xf32> to vector<8x1x512xf32>
    tpu.vector_store %arg5[%c0_30, %c1_31, %c0_32], %43 {strides = array<i32>} : memref<8x2x512xf32, #tpu.memory_space<vmem>>, vector<8x1x512xf32>,
    return
  }
  func.func @transform_0(%arg0: i32) -> (i32, i32, i32) {
    %c0_i32 = arith.constant 0 : i32
    %c0_i32_0 = arith.constant 0 : i32
    %c0_i32_1 = arith.constant 0 : i32
    return %arg0, %c0_i32, %c0_i32_0 : i32, i32, i32
  }
  func.func @transform_1(%arg0: i32) -> (i32, i32, i32) {
    %c0_i32 = arith.constant 0 : i32
    %c0_i32_0 = arith.constant 0 : i32
    %c0_i32_1 = arith.constant 0 : i32
    %c0_i32_2 = arith.constant 0 : i32
    return %c0_i32, %c0_i32_0, %c0_i32_1 : i32, i32, i32
  }
  func.func @transform_2(%arg0: i32) -> (i32, i32) {
    %c0_i32 = arith.constant 0 : i32
    %c0_i32_0 = arith.constant 0 : i32
    %c0_i32_1 = arith.constant 0 : i32
    return %c0_i32, %c0_i32_0 : i32, i32
  }
  func.func @transform_3(%arg0: i32) -> (i32, i32) {
    %c0_i32 = arith.constant 0 : i32
    %c0_i32_0 = arith.constant 0 : i32
    %c0_i32_1 = arith.constant 0 : i32
    return %c0_i32, %c0_i32_0 : i32, i32
  }
  func.func @transform_4(%arg0: i32) -> (i32, i32, i32) {
    %c0_i32 = arith.constant 0 : i32
    %c0_i32_0 = arith.constant 0 : i32
    %c0_i32_1 = arith.constant 0 : i32
    return %arg0, %c0_i32, %c0_i32_0 : i32, i32, i32
  }
}

</mosaic_0001>

<llo_original>
// kernel: tpu_custom_call.1
$region0: #{tpu_custom_call.1}
  #allocation0 [shape = 'u32[]', space=smem, size = 0x4, offset = 0x4, fixed_abs, tag = 'smem constant byte address 0x4 - core index']
  #allocation1 [shape = 'u32[144,128]{1,0:T(1,128)}', space=vmem, size = 0x12000, scoped, tag = 'internal scratch']
  %s0 = inlined_call_operand.hbm [shape: f32[8,2,16], index: 0, kind: input, shape index: {}]
  %s1 = inlined_call_operand.hbm [shape: f32[2,16,32], index: 1, kind: input, shape index: {}]
  %s2 = inlined_call_operand.hbm [shape: f32[32,512], index: 2, kind: input, shape index: {}]
  %s3 = inlined_call_operand.vmem [shape: f32[1,512], index: 3, kind: input, shape index: {}]
  %s4 = inlined_call_operand.hbm [shape: f32[8,2,512], index: 4, kind: output, shape index: {}]
  %s5 = sld [smem:[#allocation0]]
  $region38: #{tpu_custom_call.1} parent=0
    _
  %s7 = ssub.s32 1, %s5
  %s8 = scalar_select 0, %s7, %s5
  $region1: #{tpu_custom_call.1} parent=0
    #allocation2 [shape = 'u8[8192]{0}', space=vmem, size = 0x2000, scoped, tag = 'input window, operand 0, single buffered']
    #allocation3 [shape = 's32[1]{0}', space=sflag, size = 0x4, scoped, tag = 'scoped memory for tpu_custom_call.1']
    #allocation4 [shape = 's32[1]{0}', space=sflag, size = 0x4, scoped, tag = 'scoped memory for tpu_custom_call.1']
    #allocation5 [shape = 'u8[16384]{0}', space=vmem, size = 0x4000, scoped, tag = 'input window, operand 1, single buffered']
    #allocation6 [shape = 's32[1]{0}', space=sflag, size = 0x4, scoped, tag = 'scoped memory for tpu_custom_call.1']
    #allocation7 [shape = 'u8[65536]{0}', space=vmem, size = 0x10000, scoped, tag = 'input window, operand 2, single buffered']
    #allocation8 [shape = 'u8[32768]{0}', space=vmem, size = 0x8000, scoped, tag = 'output window, operand 0, single buffered']
    %9 = vsyncpa [#allocation3], 0
    %10 = vsyncpa [#allocation6], 0
    %11 = vsyncpa [#allocation4], 0
    // Predicated region
    $region2: #{tpu_custom_call.1} parent=1 // pred_check
      _
    $region3: #{tpu_custom_call.1} parent=1 // pred_check_branch
      %13 = sbr.rel (0) target = $region5
    $region4: #{tpu_custom_call.1} parent=1 // pred_region
      %s15 = ssub.s32 256, 256
      %16 = vsyncadd [#allocation3], %s15
      %s17 = sshll.u32 [#allocation2], 4
      %s18 = int_to_ptr.vmem [resolvable:$true] %s17
      %23 = dma.hbm_to_vmem [thread:$0]  %s0, 256, %s18, [#allocation3], 32, 32, 2
    $region5: #{tpu_custom_call.1} parent=1 // pred_fallthru
      _
    // Predicated region
    $region6: #{tpu_custom_call.1} parent=1 // pred_check
      _
    $region7: #{tpu_custom_call.1} parent=1 // pred_check_branch
      %25 = sbr.rel (0) target = $region9
    $region8: #{tpu_custom_call.1} parent=1 // pred_region
      %s27 = ssub.s32 512, 512
      %28 = vsyncadd [#allocation6], %s27
      %s29 = sshll.u32 [#allocation5], 4
      %s30 = int_to_ptr.vmem [resolvable:$true] %s29
      %35 = dma.hbm_to_vmem [thread:$0]  %s1, 512, %s30, [#allocation6], 128, 128, 8
    $region9: #{tpu_custom_call.1} parent=1 // pred_fallthru
      _
    // Predicated region
    $region10: #{tpu_custom_call.1} parent=1 // pred_check
      _
    $region11: #{tpu_custom_call.1} parent=1 // pred_check_branch
      %37 = sbr.rel (0) target = $region13
    $region12: #{tpu_custom_call.1} parent=1 // pred_region
      %s39 = ssub.s32 2048, 2048
      %40 = vsyncadd [#allocation6], %s39
      %s41 = sshll.u32 [#allocation7], 4
      %s42 = int_to_ptr.vmem [resolvable:$true] %s41
      %47 = dma.hbm_to_vmem [thread:$0]  %s2, 2048, %s42, [#allocation6], 512, 512, 32
    $region13: #{tpu_custom_call.1} parent=1 // pred_fallthru
      _
    // Predicated region
    $region14: #{tpu_custom_call.1} parent=1 // pred_check
      _
    $region15: #{tpu_custom_call.1} parent=1 // pred_check_branch
      %49 = sbr.rel (0) target = $region17
    $region16: #{tpu_custom_call.1} parent=1 // pred_region
      _
    $region17: #{tpu_custom_call.1} parent=1 // pred_fallthru
      _
    // Predicated region
    $region18: #{tpu_custom_call.1} parent=1 // pred_check
      _
    $region19: #{tpu_custom_call.1} parent=1 // pred_check_branch
      %51 = sbr.rel (0) target = $region21
    $region20: #{tpu_custom_call.1} parent=1 // pred_region
      %52 = dma.done [#allocation3], 256
    $region21: #{tpu_custom_call.1} parent=1 // pred_fallthru
      _
    // Predicated region
    $region22: #{tpu_custom_call.1} parent=1 // pred_check
      _
    $region23: #{tpu_custom_call.1} parent=1 // pred_check_branch
      %54 = sbr.rel (0) target = $region25
    $region24: #{tpu_custom_call.1} parent=1 // pred_region
      %55 = dma.done [#allocation6], 512
    $region25: #{tpu_custom_call.1} parent=1 // pred_fallthru
      _
    // Predicated region
    $region26: #{tpu_custom_call.1} parent=1 // pred_check
      _
    $region27: #{tpu_custom_call.1} parent=1 // pred_check_branch
      %57 = sbr.rel (0) target = $region29
    $region28: #{tpu_custom_call.1} parent=1 // pred_region
      %58 = dma.done [#allocation6], 2048
    $region29: #{tpu_custom_call.1} parent=1 // pred_fallthru
      _
    %v59 = vld [vmem:[#allocation2] sm:$0x1]
    %v60 = vld [vmem:[#allocation2 + $0x2] sm:$0x1]
    %v61 = vld [vmem:[#allocation2 + $0x4] sm:$0x1]
    %v62 = vld [vmem:[#allocation2 + $0x6] sm:$0x1]
    %v63 = vld [vmem:[#allocation2 + $0x8] sm:$0x1]
    %v64 = vld [vmem:[#allocation2 + $0xa] sm:$0x1]
    %v65 = vld [vmem:[#allocation2 + $0xc] sm:$0x1]
    %v66 = vld [vmem:[#allocation2 + $0xe] sm:$0x1]
    %v67 = vld [vmem:[#allocation5] sm:$0xff]
    %v68 = vld [vmem:[#allocation5 + $0x8] sm:$0xff]
    %v77 = vrot.slane %v60, 7
    %vm78 = vcmask 1041409
    %v79 = vsel %vm78, %v77, %v59
    %v80 = vrot.slane %v61, 6
    %vm81 = vcmask 1042434
    %v82 = vsel %vm81, %v80, %v79
    %v83 = vrot.slane %v62, 5
    %vm84 = vcmask 1043459
    %v85 = vsel %vm84, %v83, %v82
    %v86 = vrot.slane %v63, 4
    %vm87 = vcmask 1044484
    %v88 = vsel %vm87, %v86, %v85
    %v89 = vrot.slane %v64, 3
    %vm90 = vcmask 1045509
    %v91 = vsel %vm90, %v89, %v88
    %v92 = vrot.slane %v65, 2
    %vm93 = vcmask 1046534
    %v94 = vsel %vm93, %v92, %v91
    %v95 = vrot.slane %v66, 1
    %vm96 = vcmask 1047559
    %v97 = vsel %vm96, %v95, %v94
    %vm98 = vcmask 130048
    %v99 = vsel %vm98, %v97, 0
    %101 = vmatprep.subr.mxu0 0.0
    %102 = vmatpush1.msra.mxu0 %v67
    %103 = vmatprep.subr.mxu0 0.0
    %104 = vmatpush1.msra.mxu0 %v68
    %105 = vmatprep.subr.mxu0 0.0
    %106 = vmatpush1.msra.mxu0 0.0
    %107 = vmatprep.subr.mxu0 0.0
    %108 = vmatpush1.msra.mxu0 0.0
    %109 = vmatprep.subr.mxu0 0.0
    %110 = vmatpush1.msra.mxu0 0.0
    %111 = vmatprep.subr.mxu0 0.0
    %112 = vmatpush1.msra.mxu0 0.0
    %113 = vmatprep.subr.mxu0 0.0
    %114 = vmatpush1.msra.mxu0 0.0
    %115 = vmatprep.subr.mxu0 0.0
    %116 = vmatpush1.msra.mxu0 0.0
    %117 = vmatprep.subr.mxu0 0.0
    %118 = vmatpush1.msra.mxu0 0.0
    %119 = vmatprep.subr.mxu0 0.0
    %120 = vmatpush1.msra.mxu0 0.0
    %121 = vmatprep.subr.mxu0 0.0
    %122 = vmatpush1.msra.mxu0 0.0
    %123 = vmatprep.subr.mxu0 0.0
    %124 = vmatpush1.msra.mxu0 0.0
    %125 = vmatprep.subr.mxu0 0.0
    %126 = vmatpush1.msra.mxu0 0.0
    %127 = vmatprep.subr.mxu0 0.0
    %128 = vmatpush1.msra.mxu0 0.0
    %129 = vmatprep.subr.mxu0 0.0
    %130 = vmatpush1.msra.mxu0 0.0
    %131 = vmatprep.subr.mxu0 0.0
    %132 = vmatpush1.msra.mxu0 0.0
    %133 = vmatprep.subr.mxu0 0.0
    %134 = vmatpush1.msra.mxu0 0.0
    %135 = vmatprep.subr.mxu0 0.0
    %136 = vmatpush1.msra.mxu0 0.0
    %137 = vmatprep.subr.mxu0 0.0
    %138 = vmatpush1.msra.mxu0 0.0
    %139 = vmatprep.subr.mxu0 0.0
    %140 = vmatpush1.msra.mxu0 0.0
    %141 = vmatprep.subr.mxu0 0.0
    %142 = vmatpush1.msra.mxu0 0.0
    %143 = vmatprep.subr.mxu0 0.0
    %144 = vmatpush1.msra.mxu0 0.0
    %145 = vmatprep.subr.mxu0 0.0
    %146 = vmatpush1.msra.mxu0 0.0
    %147 = vmatprep.subr.mxu0 0.0
    %148 = vmatpush1.msra.mxu0 0.0
    %149 = vmatprep.subr.mxu0 0.0
    %150 = vmatpush1.msra.mxu0 0.0
    %151 = vmatprep.subr.mxu0 0.0
    %152 = vmatpush1.msra.mxu0 0.0
    %153 = vmatprep.subr.mxu0 0.0
    %154 = vmatpush1.msra.mxu0 0.0
    %155 = vmatprep.subr.mxu0 0.0
    %156 = vmatpush1.msra.mxu0 0.0
    %157 = vmatprep.subr.mxu0 0.0
    %158 = vmatpush1.msra.mxu0 0.0
    %159 = vmatprep.subr.mxu0 0.0
    %160 = vmatpush1.msra.mxu0 0.0
    %161 = vmatprep.subr.mxu0 0.0
    %162 = vmatpush1.msra.mxu0 0.0
    %163 = vmatprep.subr.mxu0 0.0
    %164 = vmatpush1.msra.mxu0 0.0
    %165 = vmatprep.mubr.f32.mxu0 0.0
    %166 = vmatmul.mubr.f32.gmra.mrb[0].mxu0 %v99
    %v167 = vpop.f32.mrb[0].mxu0
    %v168 = vadd.f32 0.0, %v167
    %v169 = vpop.f32.mrb[0].mxu0
    %170 = vdwg.mxu0
    %v172 = vsel %vm98, %v97, 0.0
    %173 = vadd.xlane.f32.xlu0 %v172
    %v174 = vpop.xlane.xlu0 %173
    %vm175 = vcmp.eq.f32.partialorder %v174, 0.0
    %v176 = vsel %vm175, 1e-05, %v174
    %v177 = vrcp.pop %v176
    %v178 = vmul.f32 %v168, %v177
    %v179 = vld [vmem:[#allocation7] sm:$0xff]
    %v180 = vld [vmem:[#allocation7 + $0x8] sm:$0xff]
    %v181 = vld [vmem:[#allocation7 + $0x10] sm:$0xff]
    %v182 = vld [vmem:[#allocation7 + $0x18] sm:$0xff]
    %v183 = vld [vmem:[#allocation7 + $0x20] sm:$0xff]
    %v184 = vld [vmem:[#allocation7 + $0x28] sm:$0xff]
    %v185 = vld [vmem:[#allocation7 + $0x30] sm:$0xff]
    %v186 = vld [vmem:[#allocation7 + $0x38] sm:$0xff]
    %v187 = vld [vmem:[#allocation7 + $0x40] sm:$0xff]
    %v188 = vld [vmem:[#allocation7 + $0x48] sm:$0xff]
    %v189 = vld [vmem:[#allocation7 + $0x50] sm:$0xff]
    %v190 = vld [vmem:[#allocation7 + $0x58] sm:$0xff]
    %v191 = vld [vmem:[#allocation7 + $0x60] sm:$0xff]
    %v192 = vld [vmem:[#allocation7 + $0x68] sm:$0xff]
    %v193 = vld [vmem:[#allocation7 + $0x70] sm:$0xff]
    %v194 = vld [vmem:[#allocation7 + $0x78] sm:$0xff]
    %v195 = vld [vmem:[%s3] sm:$0xf]
    %v197 = vlaneseq
    %v198 = vshrl.u32 %v197, 7
    %v199 = vsub.s32 0, %v198
    %v200 = vrot.slane %v195, %v199
    %v201 = vlaneseq
    %v202 = vshrl.u32 %v201, 7
    %v203 = vsub.s32 1, %v202
    %v204 = vrot.slane %v195, %v203
    %v205 = vlaneseq
    %v206 = vshrl.u32 %v205, 7
    %v207 = vsub.s32 2, %v206
    %v208 = vrot.slane %v195, %v207
    %v209 = vlaneseq
    %v210 = vshrl.u32 %v209, 7
    %v211 = vsub.s32 3, %v210
    %v212 = vrot.slane %v195, %v211
    %vm217 = vcmask 261120
    %v219 = vsel %vm217, %v178, 0
    %221 = vmatprep.subr.mxu0 %v180
    %222 = vmatpush1.msra.mxu0 %v179
    %223 = vmatprep.subr.mxu0 %v184
    %224 = vmatpush1.msra.mxu0 %v183
    %225 = vmatprep.subr.mxu0 %v188
    %226 = vmatpush1.msra.mxu0 %v187
    %227 = vmatprep.subr.mxu0 %v192
    %228 = vmatpush1.msra.mxu0 %v191
    %229 = vmatprep.subr.mxu0 0.0
    %230 = vmatpush1.msra.mxu0 0.0
    %231 = vmatprep.subr.mxu0 0.0
    %232 = vmatpush1.msra.mxu0 0.0
    %233 = vmatprep.subr.mxu0 0.0
    %234 = vmatpush1.msra.mxu0 0.0
    %235 = vmatprep.subr.mxu0 0.0
    %236 = vmatpush1.msra.mxu0 0.0
    %237 = vmatprep.subr.mxu0 0.0
    %238 = vmatpush1.msra.mxu0 0.0
    %239 = vmatprep.subr.mxu0 0.0
    %240 = vmatpush1.msra.mxu0 0.0
    %241 = vmatprep.subr.mxu0 0.0
    %242 = vmatpush1.msra.mxu0 0.0
    %243 = vmatprep.subr.mxu0 0.0
    %244 = vmatpush1.msra.mxu0 0.0
    %245 = vmatprep.subr.mxu0 0.0
    %246 = vmatpush1.msra.mxu0 0.0
    %247 = vmatprep.subr.mxu0 0.0
    %248 = vmatpush1.msra.mxu0 0.0
    %249 = vmatprep.subr.mxu0 0.0
    %250 = vmatpush1.msra.mxu0 0.0
    %251 = vmatprep.subr.mxu0 0.0
    %252 = vmatpush1.msra.mxu0 0.0
    %253 = vmatprep.subr.mxu0 0.0
    %254 = vmatpush1.msra.mxu0 0.0
    %255 = vmatprep.subr.mxu0 0.0
    %256 = vmatpush1.msra.mxu0 0.0
    %257 = vmatprep.subr.mxu0 0.0
    %258 = vmatpush1.msra.mxu0 0.0
    %259 = vmatprep.subr.mxu0 0.0
    %260 = vmatpush1.msra.mxu0 0.0
    %261 = vmatprep.subr.mxu0 0.0
    %262 = vmatpush1.msra.mxu0 0.0
    %263 = vmatprep.subr.mxu0 0.0
    %264 = vmatpush1.msra.mxu0 0.0
    %265 = vmatprep.subr.mxu0 0.0
    %266 = vmatpush1.msra.mxu0 0.0
    %267 = vmatprep.subr.mxu0 0.0
    %268 = vmatpush1.msra.mxu0 0.0
    %269 = vmatprep.subr.mxu0 0.0
    %270 = vmatpush1.msra.mxu0 0.0
    %271 = vmatprep.subr.mxu0 0.0
    %272 = vmatpush1.msra.mxu0 0.0
    %273 = vmatprep.subr.mxu0 0.0
    %274 = vmatpush1.msra.mxu0 0.0
    %275 = vmatprep.subr.mxu0 0.0
    %276 = vmatpush1.msra.mxu0 0.0
    %277 = vmatprep.subr.mxu0 0.0
    %278 = vmatpush1.msra.mxu0 0.0
    %279 = vmatprep.subr.mxu0 0.0
    %280 = vmatpush1.msra.mxu0 0.0
    %281 = vmatprep.subr.mxu0 0.0
    %282 = vmatpush1.msra.mxu0 0.0
    %283 = vmatprep.subr.mxu0 0.0
    %284 = vmatpush1.msra.mxu0 0.0
    %285 = vmatprep.mubr.f32.mxu0 0.0
    %286 = vmatmul.mubr.f32.gmra.mrb[0].mxu0 %v219
    %v287 = vpop.f32.mrb[0].mxu0
    %v288 = vadd.f32 %v200, %v287
    %v289 = vpop.f32.mrb[0].mxu0
    %v290 = vadd.f32 %v204, %v289
    %291 = vdwg.mxu0
    %292 = vmatprep.subr.mxu0 %v182
    %293 = vmatpush1.msra.mxu0 %v181
    %294 = vmatprep.subr.mxu0 %v186
    %295 = vmatpush1.msra.mxu0 %v185
    %296 = vmatprep.subr.mxu0 %v190
    %297 = vmatpush1.msra.mxu0 %v189
    %298 = vmatprep.subr.mxu0 %v194
    %299 = vmatpush1.msra.mxu0 %v193
    %300 = vmatprep.subr.mxu0 0.0
    %301 = vmatpush1.msra.mxu0 0.0
    %302 = vmatprep.subr.mxu0 0.0
    %303 = vmatpush1.msra.mxu0 0.0
    %304 = vmatprep.subr.mxu0 0.0
    %305 = vmatpush1.msra.mxu0 0.0
    %306 = vmatprep.subr.mxu0 0.0
    %307 = vmatpush1.msra.mxu0 0.0
    %308 = vmatprep.subr.mxu0 0.0
    %309 = vmatpush1.msra.mxu0 0.0
    %310 = vmatprep.subr.mxu0 0.0
    %311 = vmatpush1.msra.mxu0 0.0
    %312 = vmatprep.subr.mxu0 0.0
    %313 = vmatpush1.msra.mxu0 0.0
    %314 = vmatprep.subr.mxu0 0.0
    %315 = vmatpush1.msra.mxu0 0.0
    %316 = vmatprep.subr.mxu0 0.0
    %317 = vmatpush1.msra.mxu0 0.0
    %318 = vmatprep.subr.mxu0 0.0
    %319 = vmatpush1.msra.mxu0 0.0
    %320 = vmatprep.subr.mxu0 0.0
    %321 = vmatpush1.msra.mxu0 0.0
    %322 = vmatprep.subr.mxu0 0.0
    %323 = vmatpush1.msra.mxu0 0.0
    %324 = vmatprep.subr.mxu0 0.0
    %325 = vmatpush1.msra.mxu0 0.0
    %326 = vmatprep.subr.mxu0 0.0
    %327 = vmatpush1.msra.mxu0 0.0
    %328 = vmatprep.subr.mxu0 0.0
    %329 = vmatpush1.msra.mxu0 0.0
    %330 = vmatprep.subr.mxu0 0.0
    %331 = vmatpush1.msra.mxu0 0.0
    %332 = vmatprep.subr.mxu0 0.0
    %333 = vmatpush1.msra.mxu0 0.0
    %334 = vmatprep.subr.mxu0 0.0
    %335 = vmatpush1.msra.mxu0 0.0
    %336 = vmatprep.subr.mxu0 0.0
    %337 = vmatpush1.msra.mxu0 0.0
    %338 = vmatprep.subr.mxu0 0.0
    %339 = vmatpush1.msra.mxu0 0.0
    %340 = vmatprep.subr.mxu0 0.0
    %341 = vmatpush1.msra.mxu0 0.0
    %342 = vmatprep.subr.mxu0 0.0
    %343 = vmatpush1.msra.mxu0 0.0
    %344 = vmatprep.subr.mxu0 0.0
    %345 = vmatpush1.msra.mxu0 0.0
    %346 = vmatprep.subr.mxu0 0.0
    %347 = vmatpush1.msra.mxu0 0.0
    %348 = vmatprep.subr.mxu0 0.0
    %349 = vmatpush1.msra.mxu0 0.0
    %350 = vmatprep.subr.mxu0 0.0
    %351 = vmatpush1.msra.mxu0 0.0
    %352 = vmatprep.subr.mxu0 0.0
    %353 = vmatpush1.msra.mxu0 0.0
    %354 = vmatprep.subr.mxu0 0.0
    %355 = vmatpush1.msra.mxu0 0.0
    %356 = vmatprep.mubr.f32.mxu0 0.0
    %357 = vmatmul.mubr.f32.gmra.mrb[0].mxu0 %v219
    %v358 = vpop.f32.mrb[0].mxu0
    %v359 = vadd.f32 %v208, %v358
    %v360 = vpop.f32.mrb[0].mxu0
    %v361 = vadd.f32 %v212, %v360
    %362 = vdwg.mxu0
    %v367 = vcombine.low %v288, %v290
    %v368 = vcombine.high %v288, %v290
    %v369 = vcombine.low %v359, %v361
    %v370 = vcombine.high %v359, %v361
    %v372 = vunpack.c.l.s4 1966171168
    %v373 = vunpack.c.0.s8 %v372
    %v374 = vlaneseq
    %v375 = vshrl.u32 %v374, 7
    %v376 = vsub.s32 %v373, %v375
    %v377 = vrot.slane %v367, %v376
    %v379 = vunpack.c.l.s4 1966171168
    %v380 = vunpack.c.0.s8 %v379
    %v381 = vlaneseq
    %v382 = vshrl.u32 %v381, 7
    %v383 = vsub.s32 %v380, %v382
    %v384 = vrot.slane %v368, %v383
    %v386 = vunpack.c.l.s4 1966171168
    %v387 = vunpack.c.0.s8 %v386
    %v388 = vlaneseq
    %v389 = vshrl.u32 %v388, 7
    %v390 = vsub.s32 %v387, %v389
    %v391 = vrot.slane %v369, %v390
    %v393 = vunpack.c.l.s4 1966171168
    %v394 = vunpack.c.0.s8 %v393
    %v395 = vlaneseq
    %v396 = vshrl.u32 %v395, 7
    %v397 = vsub.s32 %v394, %v396
    %v398 = vrot.slane %v370, %v397
    %v399 = vcombine.low %v377, %v391
    %v400 = vcombine.high %v377, %v391
    %v401 = vcombine.low %v384, %v398
    %v402 = vcombine.high %v384, %v398
    %v404 = vunpack.c.l.s4 1966171168
    %v405 = vunpack.c.0.s8 %v404
    %v406 = vlaneseq
    %v407 = vshrl.u32 %v406, 7
    %v408 = vsub.s32 %v405, %v407
    %v409 = vrot.slane %v399, %v408
    %v411 = vunpack.c.l.s4 1966171168
    %v412 = vunpack.c.0.s8 %v411
    %v413 = vlaneseq
    %v414 = vshrl.u32 %v413, 7
    %v415 = vsub.s32 %v412, %v414
    %v416 = vrot.slane %v401, %v415
    %v418 = vunpack.c.l.s4 1966171168
    %v419 = vunpack.c.0.s8 %v418
    %v420 = vlaneseq
    %v421 = vshrl.u32 %v420, 7
    %v422 = vsub.s32 %v419, %v421
    %v423 = vrot.slane %v400, %v422
    %v425 = vunpack.c.l.s4 1966171168
    %v426 = vunpack.c.0.s8 %v425
    %v427 = vlaneseq
    %v428 = vshrl.u32 %v427, 7
    %v429 = vsub.s32 %v426, %v428
    %v430 = vrot.slane %v402, %v429
    %v431 = vcombine.high %v409, %v409
    %v432 = vcombine.high %v416, %v416
    %v433 = vcombine.high %v423, %v423
    %v434 = vcombine.high %v430, %v430
    %v443 = vlaneseq
    %vm444 = vcmp.ge.s32.totalorder %v443, 0
    %vm445 = vcmp.lt.s32.totalorder %v443, 512
    %vm446 = vmand %vm444, %vm445
    %447 = vst.msk [vmem:[#allocation8] ss:$2 sm:$0xf] %vm446, %v409
    %s448 = scalar_lea.vmem [#allocation8], 8
    %449 = vst.msk [vmem:[%s448] ss:$2 sm:$0xf] %vm446, %v423
    %s450 = scalar_lea.vmem [#allocation8], 16
    %451 = vst.msk [vmem:[%s450] ss:$2 sm:$0xf] %vm446, %v431
    %s452 = scalar_lea.vmem [#allocation8], 24
    %453 = vst.msk [vmem:[%s452] ss:$2 sm:$0xf] %vm446, %v433
    %s454 = scalar_lea.vmem [#allocation8], 32
    %455 = vst.msk [vmem:[%s454] ss:$2 sm:$0xf] %vm446, %v416
    %s456 = scalar_lea.vmem [#allocation8], 40
    %457 = vst.msk [vmem:[%s456] ss:$2 sm:$0xf] %vm446, %v430
    %s458 = scalar_lea.vmem [#allocation8], 48
    %459 = vst.msk [vmem:[%s458] ss:$2 sm:$0xf] %vm446, %v432
    %s460 = scalar_lea.vmem [#allocation8], 56
    %461 = vst.msk [vmem:[%s460] ss:$2 sm:$0xf] %vm446, %v434
    %v462 = vld [vmem:[#allocation2 + $0x1] sm:$0x1]
    %v463 = vld [vmem:[#allocation2 + $0x3] sm:$0x1]
    %v464 = vld [vmem:[#allocation2 + $0x5] sm:$0x1]
    %v465 = vld [vmem:[#allocation2 + $0x7] sm:$0x1]
    %v466 = vld [vmem:[#allocation2 + $0x9] sm:$0x1]
    %v467 = vld [vmem:[#allocation2 + $0xb] sm:$0x1]
    %v468 = vld [vmem:[#allocation2 + $0xd] sm:$0x1]
    %v469 = vld [vmem:[#allocation2 + $0xf] sm:$0x1]
    %s470 = scalar_lea.vmem [#allocation5], 16
    %v471 = vld [vmem:[%s470] sm:$0xff]
    %v472 = vld [vmem:[%s470 + $0x8] sm:$0xff]
    %v481 = vrot.slane %v463, 7
    %v482 = vsel %vm78, %v481, %v462
    %v483 = vrot.slane %v464, 6
    %v484 = vsel %vm81, %v483, %v482
    %v485 = vrot.slane %v465, 5
    %v486 = vsel %vm84, %v485, %v484
    %v487 = vrot.slane %v466, 4
    %v488 = vsel %vm87, %v487, %v486
    %v489 = vrot.slane %v467, 3
    %v490 = vsel %vm90, %v489, %v488
    %v491 = vrot.slane %v468, 2
    %v492 = vsel %vm93, %v491, %v490
    %v493 = vrot.slane %v469, 1
    %v494 = vsel %vm96, %v493, %v492
    %v495 = vsel %vm98, %v494, 0
    %497 = vmatprep.subr.mxu0 0.0
    %498 = vmatpush1.msra.mxu0 %v471
    %499 = vmatprep.subr.mxu0 0.0
    %500 = vmatpush1.msra.mxu0 %v472
    %501 = vmatprep.subr.mxu0 0.0
    %502 = vmatpush1.msra.mxu0 0.0
    %503 = vmatprep.subr.mxu0 0.0
    %504 = vmatpush1.msra.mxu0 0.0
    %505 = vmatprep.subr.mxu0 0.0
    %506 = vmatpush1.msra.mxu0 0.0
    %507 = vmatprep.subr.mxu0 0.0
    %508 = vmatpush1.msra.mxu0 0.0
    %509 = vmatprep.subr.mxu0 0.0
    %510 = vmatpush1.msra.mxu0 0.0
    %511 = vmatprep.subr.mxu0 0.0
    %512 = vmatpush1.msra.mxu0 0.0
    %513 = vmatprep.subr.mxu0 0.0
    %514 = vmatpush1.msra.mxu0 0.0
    %515 = vmatprep.subr.mxu0 0.0
    %516 = vmatpush1.msra.mxu0 0.0
    %517 = vmatprep.subr.mxu0 0.0
    %518 = vmatpush1.msra.mxu0 0.0
    %519 = vmatprep.subr.mxu0 0.0
    %520 = vmatpush1.msra.mxu0 0.0
    %521 = vmatprep.subr.mxu0 0.0
    %522 = vmatpush1.msra.mxu0 0.0
    %523 = vmatprep.subr.mxu0 0.0
    %524 = vmatpush1.msra.mxu0 0.0
    %525 = vmatprep.subr.mxu0 0.0
    %526 = vmatpush1.msra.mxu0 0.0
    %527 = vmatprep.subr.mxu0 0.0
    %528 = vmatpush1.msra.mxu0 0.0
    %529 = vmatprep.subr.mxu0 0.0
    %530 = vmatpush1.msra.mxu0 0.0
    %531 = vmatprep.subr.mxu0 0.0
    %532 = vmatpush1.msra.mxu0 0.0
    %533 = vmatprep.subr.mxu0 0.0
    %534 = vmatpush1.msra.mxu0 0.0
    %535 = vmatprep.subr.mxu0 0.0
    %536 = vmatpush1.msra.mxu0 0.0
    %537 = vmatprep.subr.mxu0 0.0
    %538 = vmatpush1.msra.mxu0 0.0
    %539 = vmatprep.subr.mxu0 0.0
    %540 = vmatpush1.msra.mxu0 0.0
    %541 = vmatprep.subr.mxu0 0.0
    %542 = vmatpush1.msra.mxu0 0.0
    %543 = vmatprep.subr.mxu0 0.0
    %544 = vmatpush1.msra.mxu0 0.0
    %545 = vmatprep.subr.mxu0 0.0
    %546 = vmatpush1.msra.mxu0 0.0
    %547 = vmatprep.subr.mxu0 0.0
    %548 = vmatpush1.msra.mxu0 0.0
    %549 = vmatprep.subr.mxu0 0.0
    %550 = vmatpush1.msra.mxu0 0.0
    %551 = vmatprep.subr.mxu0 0.0
    %552 = vmatpush1.msra.mxu0 0.0
    %553 = vmatprep.subr.mxu0 0.0
    %554 = vmatpush1.msra.mxu0 0.0
    %555 = vmatprep.subr.mxu0 0.0
    %556 = vmatpush1.msra.mxu0 0.0
    %557 = vmatprep.subr.mxu0 0.0
    %558 = vmatpush1.msra.mxu0 0.0
    %559 = vmatprep.subr.mxu0 0.0
    %560 = vmatpush1.msra.mxu0 0.0
    %561 = vmatprep.mubr.f32.mxu0 0.0
    %562 = vmatmul.mubr.f32.gmra.mrb[0].mxu0 %v495
    %v563 = vpop.f32.mrb[0].mxu0
    %v564 = vadd.f32 0.0, %v563
    %v565 = vpop.f32.mrb[0].mxu0
    %566 = vdwg.mxu0
    %v568 = vsel %vm98, %v494, 0.0
    %569 = vadd.xlane.f32.xlu0 %v568
    %v570 = vpop.xlane.xlu0 %569
    %vm571 = vcmp.eq.f32.partialorder %v570, 0.0
    %v572 = vsel %vm571, 1e-05, %v570
    %v573 = vrcp.pop %v572
    %v574 = vmul.f32 %v564, %v573
    %v575 = vld [vmem:[#allocation7] sm:$0xff]
    %v576 = vld [vmem:[#allocation7 + $0x8] sm:$0xff]
    %v577 = vld [vmem:[#allocation7 + $0x10] sm:$0xff]
    %v578 = vld [vmem:[#allocation7 + $0x18] sm:$0xff]
    %v579 = vld [vmem:[#allocation7 + $0x20] sm:$0xff]
    %v580 = vld [vmem:[#allocation7 + $0x28] sm:$0xff]
    %v581 = vld [vmem:[#allocation7 + $0x30] sm:$0xff]
    %v582 = vld [vmem:[#allocation7 + $0x38] sm:$0xff]
    %v583 = vld [vmem:[#allocation7 + $0x40] sm:$0xff]
    %v584 = vld [vmem:[#allocation7 + $0x48] sm:$0xff]
    %v585 = vld [vmem:[#allocation7 + $0x50] sm:$0xff]
    %v586 = vld [vmem:[#allocation7 + $0x58] sm:$0xff]
    %v587 = vld [vmem:[#allocation7 + $0x60] sm:$0xff]
    %v588 = vld [vmem:[#allocation7 + $0x68] sm:$0xff]
    %v589 = vld [vmem:[#allocation7 + $0x70] sm:$0xff]
    %v590 = vld [vmem:[#allocation7 + $0x78] sm:$0xff]
    %v591 = vld [vmem:[%s3] sm:$0xf]
    %v593 = vlaneseq
    %v594 = vshrl.u32 %v593, 7
    %v595 = vsub.s32 0, %v594
    %v596 = vrot.slane %v591, %v595
    %v597 = vlaneseq
    %v598 = vshrl.u32 %v597, 7
    %v599 = vsub.s32 1, %v598
    %v600 = vrot.slane %v591, %v599
    %v601 = vlaneseq
    %v602 = vshrl.u32 %v601, 7
    %v603 = vsub.s32 2, %v602
    %v604 = vrot.slane %v591, %v603
    %v605 = vlaneseq
    %v606 = vshrl.u32 %v605, 7
    %v607 = vsub.s32 3, %v606
    %v608 = vrot.slane %v591, %v607
    %v614 = vsel %vm217, %v574, 0
    %616 = vmatprep.subr.mxu0 %v576
    %617 = vmatpush1.msra.mxu0 %v575
    %618 = vmatprep.subr.mxu0 %v580
    %619 = vmatpush1.msra.mxu0 %v579
    %620 = vmatprep.subr.mxu0 %v584
    %621 = vmatpush1.msra.mxu0 %v583
    %622 = vmatprep.subr.mxu0 %v588
    %623 = vmatpush1.msra.mxu0 %v587
    %624 = vmatprep.subr.mxu0 0.0
    %625 = vmatpush1.msra.mxu0 0.0
    %626 = vmatprep.subr.mxu0 0.0
    %627 = vmatpush1.msra.mxu0 0.0
    %628 = vmatprep.subr.mxu0 0.0
    %629 = vmatpush1.msra.mxu0 0.0
    %630 = vmatprep.subr.mxu0 0.0
    %631 = vmatpush1.msra.mxu0 0.0
    %632 = vmatprep.subr.mxu0 0.0
    %633 = vmatpush1.msra.mxu0 0.0
    %634 = vmatprep.subr.mxu0 0.0
    %635 = vmatpush1.msra.mxu0 0.0
    %636 = vmatprep.subr.mxu0 0.0
    %637 = vmatpush1.msra.mxu0 0.0
    %638 = vmatprep.subr.mxu0 0.0
    %639 = vmatpush1.msra.mxu0 0.0
    %640 = vmatprep.subr.mxu0 0.0
    %641 = vmatpush1.msra.mxu0 0.0
    %642 = vmatprep.subr.mxu0 0.0
    %643 = vmatpush1.msra.mxu0 0.0
    %644 = vmatprep.subr.mxu0 0.0
    %645 = vmatpush1.msra.mxu0 0.0
    %646 = vmatprep.subr.mxu0 0.0
    %647 = vmatpush1.msra.mxu0 0.0
    %648 = vmatprep.subr.mxu0 0.0
    %649 = vmatpush1.msra.mxu0 0.0
    %650 = vmatprep.subr.mxu0 0.0
    %651 = vmatpush1.msra.mxu0 0.0
    %652 = vmatprep.subr.mxu0 0.0
    %653 = vmatpush1.msra.mxu0 0.0
    %654 = vmatprep.subr.mxu0 0.0
    %655 = vmatpush1.msra.mxu0 0.0
    %656 = vmatprep.subr.mxu0 0.0
    %657 = vmatpush1.msra.mxu0 0.0
    %658 = vmatprep.subr.mxu0 0.0
    %659 = vmatpush1.msra.mxu0 0.0
    %660 = vmatprep.subr.mxu0 0.0
    %661 = vmatpush1.msra.mxu0 0.0
    %662 = vmatprep.subr.mxu0 0.0
    %663 = vmatpush1.msra.mxu0 0.0
    %664 = vmatprep.subr.mxu0 0.0
    %665 = vmatpush1.msra.mxu0 0.0
    %666 = vmatprep.subr.mxu0 0.0
    %667 = vmatpush1.msra.mxu0 0.0
    %668 = vmatprep.subr.mxu0 0.0
    %669 = vmatpush1.msra.mxu0 0.0
    %670 = vmatprep.subr.mxu0 0.0
    %671 = vmatpush1.msra.mxu0 0.0
    %672 = vmatprep.subr.mxu0 0.0
    %673 = vmatpush1.msra.mxu0 0.0
    %674 = vmatprep.subr.mxu0 0.0
    %675 = vmatpush1.msra.mxu0 0.0
    %676 = vmatprep.subr.mxu0 0.0
    %677 = vmatpush1.msra.mxu0 0.0
    %678 = vmatprep.subr.mxu0 0.0
    %679 = vmatpush1.msra.mxu0 0.0
    %680 = vmatprep.mubr.f32.mxu0 0.0
    %681 = vmatmul.mubr.f32.gmra.mrb[0].mxu0 %v614
    %v682 = vpop.f32.mrb[0].mxu0
    %v683 = vadd.f32 %v596, %v682
    %v684 = vpop.f32.mrb[0].mxu0
    %v685 = vadd.f32 %v600, %v684
    %686 = vdwg.mxu0
    %687 = vmatprep.subr.mxu0 %v578
    %688 = vmatpush1.msra.mxu0 %v577
    %689 = vmatprep.subr.mxu0 %v582
    %690 = vmatpush1.msra.mxu0 %v581
    %691 = vmatprep.subr.mxu0 %v586
    %692 = vmatpush1.msra.mxu0 %v585
    %693 = vmatprep.subr.mxu0 %v590
    %694 = vmatpush1.msra.mxu0 %v589
    %695 = vmatprep.subr.mxu0 0.0
    %696 = vmatpush1.msra.mxu0 0.0
    %697 = vmatprep.subr.mxu0 0.0
    %698 = vmatpush1.msra.mxu0 0.0
    %699 = vmatprep.subr.mxu0 0.0
    %700 = vmatpush1.msra.mxu0 0.0
    %701 = vmatprep.subr.mxu0 0.0
    %702 = vmatpush1.msra.mxu0 0.0
    %703 = vmatprep.subr.mxu0 0.0
    %704 = vmatpush1.msra.mxu0 0.0
    %705 = vmatprep.subr.mxu0 0.0
    %706 = vmatpush1.msra.mxu0 0.0
    %707 = vmatprep.subr.mxu0 0.0
    %708 = vmatpush1.msra.mxu0 0.0
    %709 = vmatprep.subr.mxu0 0.0
    %710 = vmatpush1.msra.mxu0 0.0
    %711 = vmatprep.subr.mxu0 0.0
    %712 = vmatpush1.msra.mxu0 0.0
    %713 = vmatprep.subr.mxu0 0.0
    %714 = vmatpush1.msra.mxu0 0.0
    %715 = vmatprep.subr.mxu0 0.0
    %716 = vmatpush1.msra.mxu0 0.0
    %717 = vmatprep.subr.mxu0 0.0
    %718 = vmatpush1.msra.mxu0 0.0
    %719 = vmatprep.subr.mxu0 0.0
    %720 = vmatpush1.msra.mxu0 0.0
    %721 = vmatprep.subr.mxu0 0.0
    %722 = vmatpush1.msra.mxu0 0.0
    %723 = vmatprep.subr.mxu0 0.0
    %724 = vmatpush1.msra.mxu0 0.0
    %725 = vmatprep.subr.mxu0 0.0
    %726 = vmatpush1.msra.mxu0 0.0
    %727 = vmatprep.subr.mxu0 0.0
    %728 = vmatpush1.msra.mxu0 0.0
    %729 = vmatprep.subr.mxu0 0.0
    %730 = vmatpush1.msra.mxu0 0.0
    %731 = vmatprep.subr.mxu0 0.0
    %732 = vmatpush1.msra.mxu0 0.0
    %733 = vmatprep.subr.mxu0 0.0
    %734 = vmatpush1.msra.mxu0 0.0
    %735 = vmatprep.subr.mxu0 0.0
    %736 = vmatpush1.msra.mxu0 0.0
    %737 = vmatprep.subr.mxu0 0.0
    %738 = vmatpush1.msra.mxu0 0.0
    %739 = vmatprep.subr.mxu0 0.0
    %740 = vmatpush1.msra.mxu0 0.0
    %741 = vmatprep.subr.mxu0 0.0
    %742 = vmatpush1.msra.mxu0 0.0
    %743 = vmatprep.subr.mxu0 0.0
    %744 = vmatpush1.msra.mxu0 0.0
    %745 = vmatprep.subr.mxu0 0.0
    %746 = vmatpush1.msra.mxu0 0.0
    %747 = vmatprep.subr.mxu0 0.0
    %748 = vmatpush1.msra.mxu0 0.0
    %749 = vmatprep.subr.mxu0 0.0
    %750 = vmatpush1.msra.mxu0 0.0
    %751 = vmatprep.mubr.f32.mxu0 0.0
    %752 = vmatmul.mubr.f32.gmra.mrb[0].mxu0 %v614
    %v753 = vpop.f32.mrb[0].mxu0
    %v754 = vadd.f32 %v604, %v753
    %v755 = vpop.f32.mrb[0].mxu0
    %v756 = vadd.f32 %v608, %v755
    %757 = vdwg.mxu0
    %v762 = vcombine.low %v683, %v685
    %v763 = vcombine.high %v683, %v685
    %v764 = vcombine.low %v754, %v756
    %v765 = vcombine.high %v754, %v756
    %v767 = vunpack.c.l.s4 1966171168
    %v768 = vunpack.c.0.s8 %v767
    %v769 = vlaneseq
    %v770 = vshrl.u32 %v769, 7
    %v771 = vsub.s32 %v768, %v770
    %v772 = vrot.slane %v762, %v771
    %v774 = vunpack.c.l.s4 1966171168
    %v775 = vunpack.c.0.s8 %v774
    %v776 = vlaneseq
    %v777 = vshrl.u32 %v776, 7
    %v778 = vsub.s32 %v775, %v777
    %v779 = vrot.slane %v763, %v778
    %v781 = vunpack.c.l.s4 1966171168
    %v782 = vunpack.c.0.s8 %v781
    %v783 = vlaneseq
    %v784 = vshrl.u32 %v783, 7
    %v785 = vsub.s32 %v782, %v784
    %v786 = vrot.slane %v764, %v785
    %v788 = vunpack.c.l.s4 1966171168
    %v789 = vunpack.c.0.s8 %v788
    %v790 = vlaneseq
    %v791 = vshrl.u32 %v790, 7
    %v792 = vsub.s32 %v789, %v791
    %v793 = vrot.slane %v765, %v792
    %v794 = vcombine.low %v772, %v786
    %v795 = vcombine.high %v772, %v786
    %v796 = vcombine.low %v779, %v793
    %v797 = vcombine.high %v779, %v793
    %v799 = vunpack.c.l.s4 1966171168
    %v800 = vunpack.c.0.s8 %v799
    %v801 = vlaneseq
    %v802 = vshrl.u32 %v801, 7
    %v803 = vsub.s32 %v800, %v802
    %v804 = vrot.slane %v794, %v803
    %v806 = vunpack.c.l.s4 1966171168
    %v807 = vunpack.c.0.s8 %v806
    %v808 = vlaneseq
    %v809 = vshrl.u32 %v808, 7
    %v810 = vsub.s32 %v807, %v809
    %v811 = vrot.slane %v796, %v810
    %v813 = vunpack.c.l.s4 1966171168
    %v814 = vunpack.c.0.s8 %v813
    %v815 = vlaneseq
    %v816 = vshrl.u32 %v815, 7
    %v817 = vsub.s32 %v814, %v816
    %v818 = vrot.slane %v795, %v817
    %v820 = vunpack.c.l.s4 1966171168
    %v821 = vunpack.c.0.s8 %v820
    %v822 = vlaneseq
    %v823 = vshrl.u32 %v822, 7
    %v824 = vsub.s32 %v821, %v823
    %v825 = vrot.slane %v797, %v824
    %v826 = vcombine.high %v804, %v804
    %v827 = vcombine.high %v811, %v811
    %v828 = vcombine.high %v818, %v818
    %v829 = vcombine.high %v825, %v825
    %s838 = scalar_lea.vmem [#allocation8], 1
    %839 = vst.msk [vmem:[%s838] ss:$2 sm:$0xf] %vm446, %v804
    %s840 = scalar_lea.vmem [#allocation8], 9
    %841 = vst.msk [vmem:[%s840] ss:$2 sm:$0xf] %vm446, %v818
    %s842 = scalar_lea.vmem [#allocation8], 17
    %843 = vst.msk [vmem:[%s842] ss:$2 sm:$0xf] %vm446, %v826
    %s844 = scalar_lea.vmem [#allocation8], 25
    %845 = vst.msk [vmem:[%s844] ss:$2 sm:$0xf] %vm446, %v828
    %s846 = scalar_lea.vmem [#allocation8], 33
    %847 = vst.msk [vmem:[%s846] ss:$2 sm:$0xf] %vm446, %v811
    %s848 = scalar_lea.vmem [#allocation8], 41
    %849 = vst.msk [vmem:[%s848] ss:$2 sm:$0xf] %vm446, %v825
    %s850 = scalar_lea.vmem [#allocation8], 49
    %851 = vst.msk [vmem:[%s850] ss:$2 sm:$0xf] %vm446, %v827
    %s852 = scalar_lea.vmem [#allocation8], 57
    %853 = vst.msk [vmem:[%s852] ss:$2 sm:$0xf] %vm446, %v829
    // Predicated region
    $region30: #{tpu_custom_call.1} parent=1 // pred_check
      _
    $region31: #{tpu_custom_call.1} parent=1 // pred_check_branch
      %855 = sbr.rel (0) target = $region33
    $region32: #{tpu_custom_call.1} parent=1 // pred_region
      %s857 = ssub.s32 1024, 1024
      %858 = vsyncadd [#allocation4], %s857
      %s859 = sshll.u32 [#allocation8], 4
      %s860 = int_to_ptr.vmem [resolvable:$true] %s859
      %865 = dma.vmem_to_hbm [thread:$0]  %s860, 1024, %s4, [#allocation4], 128, 128, 8
    $region33: #{tpu_custom_call.1} parent=1 // pred_fallthru
      _
    // Predicated region
    $region34: #{tpu_custom_call.1} parent=1 // pred_check
      _
    $region35: #{tpu_custom_call.1} parent=1 // pred_check_branch
      %867 = sbr.rel (0) target = $region37
    $region36: #{tpu_custom_call.1} parent=1 // pred_region
      %868 = dma.done [#allocation4], 1024
    $region37: #{tpu_custom_call.1} parent=1 // pred_fallthru
      _
    %869 = vsyncpa [#allocation3], 1
    %870 = vsyncpa [#allocation6], 1
    %871 = vsyncpa [#allocation4], 1

</llo_original>
